<compile_context>
chip_gen: v7x
topology: tpu7x:2x2x1
jax: 0.10.0
libtpu: 0.0.40
codegen_flags: <defaults>
</compile_context>

<pallas_src>
import jax
import jax.numpy as jnp
from jax import lax
from jax.experimental import pallas as pl
from jax.experimental.pallas import tpu as pltpu


def _round_up(a, b):
    return (a + b - 1) // b * b


def _pick_vocab_tiling(V, tile_v_target=1024):
    """Choose (tile_v, v_pad).

    Prefer a tile_v that exactly divides round_up(V, 128): then V is only padded to the
    next multiple of 128 and no wasted zero columns are re-streamed per row tile.
    Fall back to a single slightly-oversized tile for small vocabs, or to padding V up
    to a multiple of a 512-wide tile for awkward large vocabs.
    """
    v128 = _round_up(V, 128)
    units = v128 // 128
    max_units = max(1, min(tile_v_target // 128, units))
    for d in range(max_units, 0, -1):
        if units % d == 0 and d * 128 * 2 >= min(tile_v_target, v128):
            return d * 128, v128
    if v128 <= 2 * tile_v_target:
        return v128, v128                       # one (slightly oversized) vocab tile
    tv = max(512, tile_v_target // 2)
    return tv, _round_up(V, tv)


def _make_lm_loss_kernel(n_pad_cols, tile_v, num_v_tiles):
    """Row-tile x vocab-tile kernel: streamed projection + online logsumexp + masked NLL."""

    def kernel(flags_ref, x_ref, w_ref, tgt_ref, msk_ref, out_ref, m_ref, l_ref, p_ref):
        i = pl.program_id(0)
        j = pl.program_id(1)
        valid = flags_ref[i] != 0                # any non-masked row in this row tile?
        last = j == num_v_tiles - 1

        @pl.when(valid & (j == 0))
        def _init():
            m_ref[...] = jnp.full(m_ref.shape, -1e30, dtype=jnp.float32)
            l_ref[...] = jnp.zeros(l_ref.shape, jnp.float32)
            p_ref[...] = jnp.zeros(p_ref.shape, jnp.float32)

        @pl.when(valid)
        def _step():
            # (TN, H) bf16 @ (H, TV) bf16 -> f32 accumulation on the MXU.
            logits = jnp.dot(x_ref[...], w_ref[...], preferred_element_type=jnp.float32)

            # Gather the raw target logit: compare a (1, TV) lane iota against the
            # tile-local target index (broadcast) — no full-tile int32 intermediate.
            lane = lax.broadcasted_iota(jnp.int32, (1, tile_v), 1)
            tgt_local = tgt_ref[...] - j * tile_v                      # (TN, 1)
            p_ref[...] += jnp.sum(jnp.where(lane == tgt_local, logits, 0.0),
                                  axis=-1, keepdims=True)

            # Online (flash) logsumexp over the streamed vocab tiles.  Zero-padded W
            # columns contribute logit == 0 exactly; corrected analytically in finalize.
            m_old = m_ref[...]
            m_new = jnp.maximum(m_old, jnp.max(logits, axis=-1, keepdims=True))
            l_ref[...] = l_ref[...] * jnp.exp(m_old - m_new) + jnp.sum(
                jnp.exp(logits - m_new), axis=-1, keepdims=True)
            m_ref[...] = m_new

        @pl.when(valid & last)
        def _finalize():
            m = m_ref[...]
            l = l_ref[...]
            if n_pad_cols:   # static: remove the padded zero-logit columns from the norm
                l = l - float(n_pad_cols) * jnp.exp(-m)
            lse = m + jnp.log(l)                                       # (TN, 1)
            out_ref[...] = (lse - p_ref[...]) * msk_ref[...]           # masked -log p(tgt)

        @pl.when(jnp.logical_not(valid) & last)
        def _skip():
            out_ref[...] = jnp.zeros(out_ref.shape, jnp.float32)

    return kernel


def lm_criterion_pallas(x, w_out, targets, mask, *, tile_n=1024, tile_v=1024):
    """LanguageModelCriterion over flattened rows.

    x:       (N, H) hidden states (float32)
    w_out:   (H, V) vocab projection (float32)
    targets: (N,)   int32
    mask:    (N,)   float32
    returns scalar loss = sum(-logp[target] * mask) / sum(mask)

    tile_n sets the kernel's flop/byte on the streamed W matrix (keep >= ~680 on v6e,
    ~620 on v7x — and <= N/2 on v7x for megacore — >= ~240 on v5e).  tile_v only
    affects per-step overhead; 512-1024 is plenty.
    """
    N, H = x.shape
    Hw, V = w_out.shape
    assert Hw == H

    mask = mask.astype(jnp.float32)
    mask_sum = jnp.sum(mask)   # XLA-side reduce; matches the PyTorch crit (no /0 guard).

    # ---- cast to bf16 FIRST (halves every pad / DMA byte), then pad ----
    # (W in bf16 is where the DMA savings are; x stays bf16 too so the MXU runs the
    #  fast bf16 path — f32 accumulation keeps the LSE/gather accurate enough for fwd.)
    x_bf = x.astype(jnp.bfloat16)
    w_bf = w_out.astype(jnp.bfloat16)

    # H is the MXU contraction depth / X lane dim: pad to a multiple of 128.
    h_pad = _round_up(H, 128)
    if h_pad != H:
        x_bf = jnp.pad(x_bf, ((0, 0), (0, h_pad - H)))
        w_bf = jnp.pad(w_bf, ((0, h_pad - H), (0, 0)))

    # Row tiling.
    tile_n = max(8, min(_round_up(tile_n, 8), _round_up(N, 8)))
    n_pad = _round_up(N, tile_n)
    num_row_tiles = n_pad // tile_n

    # Vocab tiling (tight padding: prefer a tile that divides round_up(V, 128)).
    tile_v, v_pad = _pick_vocab_tiling(V, tile_v)
    num_v_tiles = v_pad // tile_v

    if n_pad != N:
        x_bf = jnp.pad(x_bf, ((0, n_pad - N), (0, 0)))
        targets = jnp.pad(targets, (0, n_pad - N))        # padded rows: target 0 ...
        mask = jnp.pad(mask, (0, n_pad - N))              # ... but mask 0
    if v_pad != V:
        w_bf = jnp.pad(w_bf, ((0, 0), (0, v_pad - V)))    # zero cols, corrected in-kernel

    tgt2 = targets.reshape(n_pad, 1).astype(jnp.int32)
    msk2 = mask.reshape(n_pad, 1)

    # Per-row-tile "any valid row" flag (scalar-prefetched): fully padded caption tiles
    # skip the projection + online-LSE body entirely.
    row_flags = (jnp.sum(msk2.reshape(num_row_tiles, tile_n), axis=1) > 0).astype(jnp.int32)

    grid_spec = pltpu.PrefetchScalarGridSpec(
        num_scalar_prefetch=1,
        grid=(num_row_tiles, num_v_tiles),
        in_specs=[
            pl.BlockSpec((tile_n, h_pad), lambda i, j, flags: (i, 0)),   # X row tile (bf16)
            pl.BlockSpec((h_pad, tile_v), lambda i, j, flags: (0, j)),   # streamed W tile
            pl.BlockSpec((tile_n, 1), lambda i, j, flags: (i, 0)),       # targets
            pl.BlockSpec((tile_n, 1), lambda i, j, flags: (i, 0)),       # mask
        ],
        out_specs=pl.BlockSpec((tile_n, 1), lambda i, j, flags: (i, 0)), # per-row NLL
        scratch_shapes=[
            pltpu.VMEM((tile_n, 1), jnp.float32),                        # running max m
            pltpu.VMEM((tile_n, 1), jnp.float32),                        # running sum-exp l
            pltpu.VMEM((tile_n, 1), jnp.float32),                        # gathered tgt logit
        ],
    )

    per_row_nll = pl.pallas_call(
        _make_lm_loss_kernel(v_pad - V, tile_v, num_v_tiles),
        out_shape=jax.ShapeDtypeStruct((n_pad, 1), jnp.float32),
        grid_spec=grid_spec,
        compiler_params=pltpu.CompilerParams(
            dimension_semantics=("parallel", "arbitrary"),
            # Default tiles need ~20-30 MiB double-buffered at H~2048; 48 MiB gives
            # headroom on v5e/v6e (128 MiB phys) and stays inside v7x's 64 MiB per-TC.
            vmem_limit_bytes=48 * 1024 * 1024,
        ),
    )(row_flags, x_bf, w_bf, tgt2, msk2)

    # Reference semantics: divide by sum(mask) with no guard (matches the PyTorch crit).
    return (jnp.sum(per_row_nll) / mask_sum).astype(jnp.float32)


def loss_wrapper_forward(params, fc_feats, att_feats, labels, masks, att_masks):
    """Equivalent of LossWrapper.forward with sc_flag=False, cbt=False, r2l=False."""
    B, L = labels.shape
    T = L - 1

    # ---- tiny captioning LM ("self.model") — glue in plain JAX ----
    emb = params["embed"][labels[:, :-1]]                        # (B, T, H) teacher forcing
    att_pool = jnp.sum(att_feats * att_masks[:, :, None], axis=1) / (
        jnp.sum(att_masks, axis=1, keepdims=True) + 1e-6)        # (B, F)
    ctx = jnp.tanh(fc_feats @ params["w_fc"] + att_pool @ params["w_att"])  # (B, H)
    h = jnp.tanh(emb + ctx[:, None, :])                          # (B, T, H)

    # ---- hot path in Pallas: projection + logsumexp + NLL gather + reduction ----
    x = h.reshape(B * T, -1)
    tgt = labels[:, 1:].reshape(-1)
    msk = masks[:, 1:].reshape(-1)
    loss = lm_criterion_pallas(x, params["w_out"], tgt, msk)
    return {"loss": loss}


def _reference_loss(params, fc_feats, att_feats, labels, masks, att_masks):
    """Pure-JAX f32 reference of the same forward, for a sanity check."""
    B, L = labels.shape
    emb = params["embed"][labels[:, :-1]]
    att_pool = jnp.sum(att_feats * att_masks[:, :, None], axis=1) / (
        jnp.sum(att_masks, axis=1, keepdims=True) + 1e-6)
    ctx = jnp.tanh(fc_feats @ params["w_fc"] + att_pool @ params["w_att"])
    h = jnp.tanh(emb + ctx[:, None, :])
    logits = h.reshape(B * (L - 1), -1) @ params["w_out"]
    logp = jax.nn.log_softmax(logits, axis=-1)
    tgt = labels[:, 1:].reshape(-1)
    msk = masks[:, 1:].reshape(-1)
    picked = jnp.take_along_axis(logp, tgt[:, None], axis=1)[:, 0]
    return jnp.sum(-picked * msk) / jnp.sum(msk)


if __name__ == "__main__":
    # small shapes: B=2, L=9 (T=8), A=8 att regions, F=32 feature dim, H=32 hidden, V=128 vocab
    B, L, A, F, H, V = 2, 9, 8, 32, 32, 128

    key = jax.random.PRNGKey(0)
    k_fc, k_att, k_lab, k_emb, k_wf, k_wa, k_wo = jax.random.split(key, 7)

    fc_feats = jax.random.normal(k_fc, (B, F), dtype=jnp.float32)
    att_feats = jax.random.normal(k_att, (B, A, F), dtype=jnp.float32)
    att_masks = jnp.ones((B, A), dtype=jnp.float32)
    labels = jax.random.randint(k_lab, (B, L), 0, V, dtype=jnp.int32)
    # mask: first 7 target positions valid, rest padded
    masks = (jnp.arange(L)[None, :] < 7).astype(jnp.float32) * jnp.ones((B, 1), jnp.float32)

    params = {
        "embed": 0.1 * jax.random.normal(k_emb, (V, H), dtype=jnp.float32),
        "w_fc": 0.1 * jax.random.normal(k_wf, (F, H), dtype=jnp.float32),
        "w_att": 0.1 * jax.random.normal(k_wa, (F, H), dtype=jnp.float32),
        "w_out": 0.1 * jax.random.normal(k_wo, (H, V), dtype=jnp.float32),
    }

    out = jax.jit(loss_wrapper_forward)(params, fc_feats, att_feats, labels, masks, att_masks)
    loss = jax.block_until_ready(out["loss"])

    ref = _reference_loss(params, fc_feats, att_feats, labels, masks, att_masks)
    # bf16 MXU operands vs f32 reference -> loose-ish tolerance.
    assert jnp.allclose(loss, ref, rtol=1e-2, atol=1e-2), (loss, ref)

    print("KERNEL_OK")
</pallas_src>

<mosaic_0001>
module attributes {stable_mosaic.version = 11 : i64} {
  func.func @kernel(%arg0: i32, %arg1: i32, %arg2: memref<1xi32, #tpu.memory_space<smem>>, %arg3: memref<16x128xbf16, #tpu.memory_space<vmem>>, %arg4: memref<128x128xbf16, #tpu.memory_space<vmem>>, %arg5: memref<16x1xi32, #tpu.memory_space<vmem>>, %arg6: memref<16x1xf32, #tpu.memory_space<vmem>>, %arg7: memref<16x1xf32, #tpu.memory_space<vmem>>, %arg8: memref<16x1xf32, #tpu.memory_space<vmem>>, %arg9: memref<16x1xf32, #tpu.memory_space<vmem>>, %arg10: memref<16x1xf32, #tpu.memory_space<vmem>>) attributes {dimension_semantics = [#tpu.dimension_semantics<parallel>, #tpu.dimension_semantics<arbitrary>], iteration_bounds = array<i64: 1, 1>, scalar_prefetch = 1 : i64, scratch_operands = 3 : i64, tpu.core_type = #tpu.core_type<tc>, window_params = [{transform_indices = @transform_0, window_bounds = array<i64: 16, 128>}, {transform_indices = @transform_1, window_bounds = array<i64: 128, 128>}, {transform_indices = @transform_2, window_bounds = array<i64: 16, 1>}, {transform_indices = @transform_3, window_bounds = array<i64: 16, 1>}, {transform_indices = @transform_4, window_bounds = array<i64: 16, 1>}]} {
    %0 = arith.index_cast %arg0 : i32 to index
    %1 = memref.load %arg2[%0] : memref<1xi32, #tpu.memory_space<smem>>
    %c0_i32 = arith.constant 0 : i32
    %2 = arith.cmpi ne, %1, %c0_i32 : i32
    %c0_i32_0 = arith.constant 0 : i32
    %3 = arith.cmpi eq, %arg1, %c0_i32_0 : i32
    %c0_i32_1 = arith.constant 0 : i32
    %4 = arith.cmpi eq, %arg1, %c0_i32_1 : i32
    %5 = arith.andi %2, %4 : i1
    %6 = arith.extui %5 : i1 to i32
    %c0_i32_2 = arith.constant 0 : i32
    %7 = arith.cmpi ne, %6, %c0_i32_2 : i32
    scf.if %7 {
      %cst = arith.constant -1.000000e+30 : f32
      %17 = vector.broadcast %cst : f32 to vector<16x1xf32>
      %c0 = arith.constant 0 : index
      %c0_6 = arith.constant 0 : index
      %18 = vector.load %arg8[%c0, %c0_6] : memref<16x1xf32, #tpu.memory_space<vmem>>, vector<16x1xf32>
      tpu.vector_store %arg8[%c0, %c0_6], %17 {strides = array<i32>} : memref<16x1xf32, #tpu.memory_space<vmem>>, vector<16x1xf32>,
      %cst_7 = arith.constant 0.000000e+00 : f32
      %19 = vector.broadcast %cst_7 : f32 to vector<16x1xf32>
      %c0_8 = arith.constant 0 : index
      %c0_9 = arith.constant 0 : index
      %20 = vector.load %arg9[%c0_8, %c0_9] : memref<16x1xf32, #tpu.memory_space<vmem>>, vector<16x1xf32>
      tpu.vector_store %arg9[%c0_8, %c0_9], %19 {strides = array<i32>} : memref<16x1xf32, #tpu.memory_space<vmem>>, vector<16x1xf32>,
      %cst_10 = arith.constant 0.000000e+00 : f32
      %21 = vector.broadcast %cst_10 : f32 to vector<16x1xf32>
      %c0_11 = arith.constant 0 : index
      %c0_12 = arith.constant 0 : index
      %22 = vector.load %arg10[%c0_11, %c0_12] : memref<16x1xf32, #tpu.memory_space<vmem>>, vector<16x1xf32>
      tpu.vector_store %arg10[%c0_11, %c0_12], %21 {strides = array<i32>} : memref<16x1xf32, #tpu.memory_space<vmem>>, vector<16x1xf32>,
    } else {
    }
    %8 = arith.extui %2 : i1 to i32
    %c0_i32_3 = arith.constant 0 : i32
    %9 = arith.cmpi ne, %8, %c0_i32_3 : i32
    scf.if %9 {
      %c0 = arith.constant 0 : index
      %c0_6 = arith.constant 0 : index
      %17 = vector.load %arg3[%c0, %c0_6] : memref<16x128xbf16, #tpu.memory_space<vmem>>, vector<16x128xbf16>
      %c0_7 = arith.constant 0 : index
      %c0_8 = arith.constant 0 : index
      %18 = vector.load %arg4[%c0_7, %c0_8] : memref<128x128xbf16, #tpu.memory_space<vmem>>, vector<128x128xbf16>
      %cst = arith.constant dense<0.000000e+00> : vector<16x128xf32>
      %19 = tpu.matmul %17, %18, %cst {dimension_numbers = #tpu.dot_dimension_numbers<[1], [0], [0], [1], [0, 0, 1, 1], [], []>} : vector<16x128xbf16>, vector<128x128xbf16>, vector<16x128xf32> -> vector<16x128xf32>
      %20 = tpu.iota {dimensions = array<i32: 1>} : vector<1x128xi32>
      %c0_9 = arith.constant 0 : index
      %c0_10 = arith.constant 0 : index
      %21 = vector.load %arg5[%c0_9, %c0_10] : memref<16x1xi32, #tpu.memory_space<vmem>>, vector<16x1xi32>
      %c128_i32 = arith.constant 128 : i32
      %22 = arith.muli %arg1, %c128_i32 : i32
      %23 = vector.broadcast %22 : i32 to vector<16x1xi32>
      %24 = arith.subi %21, %23 : vector<16x1xi32>
      %c0_11 = arith.constant 0 : index
      %c0_12 = arith.constant 0 : index
      %25 = vector.load %arg10[%c0_11, %c0_12] : memref<16x1xf32, #tpu.memory_space<vmem>>, vector<16x1xf32>
      %26 = vector.broadcast %20 : vector<1x128xi32> to vector<16x128xi32>
      %27 = vector.broadcast %24 : vector<16x1xi32> to vector<16x128xi32>
      %28 = arith.cmpi eq, %26, %27 : vector<16x128xi32>
      %cst_13 = arith.constant 0.000000e+00 : f32
      %29 = vector.broadcast %cst_13 : f32 to vector<16x128xf32>
      %30 = arith.select %28, %19, %29 : vector<16x128xi1>, vector<16x128xf32>
      %cst_14 = arith.constant dense<0.000000e+00> : vector<16xf32>
      %31 = vector.multi_reduction <add>, %30, %cst_14 [1] : vector<16x128xf32> to vector<16xf32>
      %32 = vector.shape_cast %31 : vector<16xf32> to vector<16x1xf32>
      %33 = arith.addf %25, %32 : vector<16x1xf32>
      %c0_15 = arith.constant 0 : index
      %c0_16 = arith.constant 0 : index
      %34 = vector.load %arg10[%c0_15, %c0_16] : memref<16x1xf32, #tpu.memory_space<vmem>>, vector<16x1xf32>
      tpu.vector_store %arg10[%c0_15, %c0_16], %33 {strides = array<i32>} : memref<16x1xf32, #tpu.memory_space<vmem>>, vector<16x1xf32>,
      %c0_17 = arith.constant 0 : index
      %c0_18 = arith.constant 0 : index
      %35 = vector.load %arg8[%c0_17, %c0_18] : memref<16x1xf32, #tpu.memory_space<vmem>>, vector<16x1xf32>
      %cst_19 = arith.constant dense<0xFF800000> : vector<16xf32>
      %36 = vector.multi_reduction <maximumf>, %19, %cst_19 [1] : vector<16x128xf32> to vector<16xf32>
      %37 = vector.shape_cast %36 : vector<16xf32> to vector<16x1xf32>
      %38 = arith.maximumf %35, %37 : vector<16x1xf32>
      %c0_20 = arith.constant 0 : index
      %c0_21 = arith.constant 0 : index
      %39 = vector.load %arg9[%c0_20, %c0_21] : memref<16x1xf32, #tpu.memory_space<vmem>>, vector<16x1xf32>
      %40 = arith.subf %35, %38 : vector<16x1xf32>
      %41 = math.exp %40 : vector<16x1xf32>
      %42 = arith.mulf %39, %41 : vector<16x1xf32>
      %43 = vector.broadcast %38 : vector<16x1xf32> to vector<16x128xf32>
      %44 = arith.subf %19, %43 : vector<16x128xf32>
      %45 = math.exp %44 : vector<16x128xf32>
      %cst_22 = arith.constant dense<0.000000e+00> : vector<16xf32>
      %46 = vector.multi_reduction <add>, %45, %cst_22 [1] : vector<16x128xf32> to vector<16xf32>
      %47 = vector.shape_cast %46 : vector<16xf32> to vector<16x1xf32>
      %48 = arith.addf %42, %47 : vector<16x1xf32>
      %c0_23 = arith.constant 0 : index
      %c0_24 = arith.constant 0 : index
      %49 = vector.load %arg9[%c0_23, %c0_24] : memref<16x1xf32, #tpu.memory_space<vmem>>, vector<16x1xf32>
      tpu.vector_store %arg9[%c0_23, %c0_24], %48 {strides = array<i32>} : memref<16x1xf32, #tpu.memory_space<vmem>>, vector<16x1xf32>,
      %c0_25 = arith.constant 0 : index
      %c0_26 = arith.constant 0 : index
      %50 = vector.load %arg8[%c0_25, %c0_26] : memref<16x1xf32, #tpu.memory_space<vmem>>, vector<16x1xf32>
      tpu.vector_store %arg8[%c0_25, %c0_26], %38 {strides = array<i32>} : memref<16x1xf32, #tpu.memory_space<vmem>>, vector<16x1xf32>,
    } else {
    }
    %10 = arith.andi %2, %3 : i1
    %11 = arith.extui %10 : i1 to i32
    %c0_i32_4 = arith.constant 0 : i32
    %12 = arith.cmpi ne, %11, %c0_i32_4 : i32
    scf.if %12 {
      %c0 = arith.constant 0 : index
      %c0_6 = arith.constant 0 : index
      %17 = vector.load %arg8[%c0, %c0_6] : memref<16x1xf32, #tpu.memory_space<vmem>>, vector<16x1xf32>
      %c0_7 = arith.constant 0 : index
      %c0_8 = arith.constant 0 : index
      %18 = vector.load %arg9[%c0_7, %c0_8] : memref<16x1xf32, #tpu.memory_space<vmem>>, vector<16x1xf32>
      %19 = math.log %18 : vector<16x1xf32>
      %20 = arith.addf %17, %19 : vector<16x1xf32>
      %c0_9 = arith.constant 0 : index
      %c0_10 = arith.constant 0 : index
      %21 = vector.load %arg10[%c0_9, %c0_10] : memref<16x1xf32, #tpu.memory_space<vmem>>, vector<16x1xf32>
      %22 = arith.subf %20, %21 : vector<16x1xf32>
      %c0_11 = arith.constant 0 : index
      %c0_12 = arith.constant 0 : index
      %23 = vector.load %arg6[%c0_11, %c0_12] : memref<16x1xf32, #tpu.memory_space<vmem>>, vector<16x1xf32>
      %24 = arith.mulf %22, %23 : vector<16x1xf32>
      %c0_13 = arith.constant 0 : index
      %c0_14 = arith.constant 0 : index
      %25 = vector.load %arg7[%c0_13, %c0_14] : memref<16x1xf32, #tpu.memory_space<vmem>>, vector<16x1xf32>
      tpu.vector_store %arg7[%c0_13, %c0_14], %24 {strides = array<i32>} : memref<16x1xf32, #tpu.memory_space<vmem>>, vector<16x1xf32>,
    } else {
    }
    %true = arith.constant true
    %13 = arith.xori %2, %true : i1
    %14 = arith.andi %13, %3 : i1
    %15 = arith.extui %14 : i1 to i32
    %c0_i32_5 = arith.constant 0 : i32
    %16 = arith.cmpi ne, %15, %c0_i32_5 : i32
    scf.if %16 {
      %cst = arith.constant 0.000000e+00 : f32
      %17 = vector.broadcast %cst : f32 to vector<16x1xf32>
      %c0 = arith.constant 0 : index
      %c0_6 = arith.constant 0 : index
      %18 = vector.load %arg7[%c0, %c0_6] : memref<16x1xf32, #tpu.memory_space<vmem>>, vector<16x1xf32>
      tpu.vector_store %arg7[%c0, %c0_6], %17 {strides = array<i32>} : memref<16x1xf32, #tpu.memory_space<vmem>>, vector<16x1xf32>,
    } else {
    }
    return
  }
  func.func @transform_0(%arg0: i32, %arg1: i32, %arg2: memref<1xi32, #tpu.memory_space<smem>>) -> (i32, i32) {
    %c0_i32 = arith.constant 0 : i32
    %c0_i32_0 = arith.constant 0 : i32
    return %arg0, %c0_i32 : i32, i32
  }
  func.func @transform_1(%arg0: i32, %arg1: i32, %arg2: memref<1xi32, #tpu.memory_space<smem>>) -> (i32, i32) {
    %c0_i32 = arith.constant 0 : i32
    %c0_i32_0 = arith.constant 0 : i32
    return %c0_i32, %arg1 : i32, i32
  }
  func.func @transform_2(%arg0: i32, %arg1: i32, %arg2: memref<1xi32, #tpu.memory_space<smem>>) -> (i32, i32) {
    %c0_i32 = arith.constant 0 : i32
    %c0_i32_0 = arith.constant 0 : i32
    return %arg0, %c0_i32 : i32, i32
  }
  func.func @transform_3(%arg0: i32, %arg1: i32, %arg2: memref<1xi32, #tpu.memory_space<smem>>) -> (i32, i32) {
    %c0_i32 = arith.constant 0 : i32
    %c0_i32_0 = arith.constant 0 : i32
    return %arg0, %c0_i32 : i32, i32
  }
  func.func @transform_4(%arg0: i32, %arg1: i32, %arg2: memref<1xi32, #tpu.memory_space<smem>>) -> (i32, i32) {
    %c0_i32 = arith.constant 0 : i32
    %c0_i32_0 = arith.constant 0 : i32
    return %arg0, %c0_i32 : i32, i32
  }
}

</mosaic_0001>

<llo_original>
// kernel: loss_wrapper_forward.1
$region0: #{loss_wrapper_forward.1}
  #allocation0 [shape = 'u32[]', space=smem, size = 0x4, offset = 0x4, fixed_abs, tag = 'smem constant byte address 0x4 - core index']
  #allocation1 [shape = 'u32[144,128]{1,0:T(1,128)}', space=vmem, size = 0x12000, scoped, tag = 'internal scratch']
  #allocation2 [shape = 'f32[16,1]{1,0:T(8,128)}', space=vmem, size = 0x2000, scoped, tag = 'scratch operand']
  #allocation3 [shape = 'f32[16,1]{1,0:T(8,128)}', space=vmem, size = 0x2000, scoped, tag = 'scratch operand']
  #allocation4 [shape = 'f32[16,1]{1,0:T(8,128)}', space=vmem, size = 0x2000, scoped, tag = 'scratch operand']
  #allocation5 [shape = 's32[1]{0}', space=sflag, size = 0x4, scoped, tag = 'scoped memory for loss_wrapper_forward.1']
  #allocation6 [shape = 's32[1]{0:T(128)S(6)}', space=smem, size = 0x200, scoped, tag = 'prefetched SMEM operand 0']
  %s0 = inlined_call_operand.<no memory space> [shape: s32[1], index: 0, kind: input, shape index: {}]
  %s1 = inlined_call_operand.vmem [shape: bf16[16,128], index: 1, kind: input, shape index: {}]
  %s2 = inlined_call_operand.vmem [shape: bf16[128,128], index: 2, kind: input, shape index: {}]
  %s3 = inlined_call_operand.vmem [shape: s32[16,1], index: 3, kind: input, shape index: {}]
  %s4 = inlined_call_operand.vmem [shape: f32[16,1], index: 4, kind: input, shape index: {}]
  %s5 = inlined_call_operand.vmem [shape: f32[16,1], index: 5, kind: output, shape index: {}]
  %s6 = sld [smem:[#allocation0]]
  $region42: #{loss_wrapper_forward.1} parent=0
    _
  %s8 = ssub.s32 1, %s6
  %s9 = scalar_select 0, %s8, %s6
  %10 = sst [smem:[#allocation6]] %s0
  // Predicated region
  $region2: #{loss_wrapper_forward.1} parent=0 // pred_check
    _
  $region3: #{loss_wrapper_forward.1} parent=0 // pred_check_branch
    %12 = sbr.rel (0) target = $region5
  $region4: #{loss_wrapper_forward.1} parent=0 // pred_region
    _
  $region5: #{loss_wrapper_forward.1} parent=0 // pred_fallthru
    _
  // Predicated region
  $region6: #{loss_wrapper_forward.1} parent=0 // pred_check
    _
  $region7: #{loss_wrapper_forward.1} parent=0 // pred_check_branch
    %14 = sbr.rel (0) target = $region9
  $region8: #{loss_wrapper_forward.1} parent=0 // pred_region
    _
  $region9: #{loss_wrapper_forward.1} parent=0 // pred_fallthru
    _
  // Predicated region
  $region10: #{loss_wrapper_forward.1} parent=0 // pred_check
    _
  $region11: #{loss_wrapper_forward.1} parent=0 // pred_check_branch
    %16 = sbr.rel (0) target = $region13
  $region12: #{loss_wrapper_forward.1} parent=0 // pred_region
    _
  $region13: #{loss_wrapper_forward.1} parent=0 // pred_fallthru
    _
  // Predicated region
  $region14: #{loss_wrapper_forward.1} parent=0 // pred_check
    _
  $region15: #{loss_wrapper_forward.1} parent=0 // pred_check_branch
    %18 = sbr.rel (0) target = $region17
  $region16: #{loss_wrapper_forward.1} parent=0 // pred_region
    _
  $region17: #{loss_wrapper_forward.1} parent=0 // pred_fallthru
    _
  %s20 = sld [smem:[#allocation6]]
  %p21 = scmp.ne.s32.totalorder %s20, 0
  %p22 = scmp.eq.s32.totalorder 0, 0
  %p23 = pnand %p21, %p22
  %p24 = pneg %p23
  // Predicated region
  $region18: #{loss_wrapper_forward.1} parent=0 // pred_check
    _
  $region19: #{loss_wrapper_forward.1} parent=0 // pred_check_branch
    %26 = sbr.rel (%p23) target = $region21
  $region20: #{loss_wrapper_forward.1} parent=0 // pred_region
    %vm27 = vcmask 7168
    %28 = vst.msk [vmem:[#allocation2] sm:$0xff] %vm27, -1e+30
    %29 = vst.msk [vmem:[#allocation2 + $0x8] sm:$0xff] %vm27, -1e+30
    %30 = vst.msk [vmem:[#allocation3] sm:$0xff] %vm27, 0.0
    %31 = vst.msk [vmem:[#allocation3 + $0x8] sm:$0xff] %vm27, 0.0
    %32 = vst.msk [vmem:[#allocation4] sm:$0xff] %vm27, 0.0
    %33 = vst.msk [vmem:[#allocation4 + $0x8] sm:$0xff] %vm27, 0.0
  $region21: #{loss_wrapper_forward.1} parent=0 // pred_fallthru
    _
  // Predicated region
  $region22: #{loss_wrapper_forward.1} parent=0 // pred_check
    %p34 = pneg %p21
  $region23: #{loss_wrapper_forward.1} parent=0 // pred_check_branch
    %36 = sbr.rel (%p34) target = $region25
  $region24: #{loss_wrapper_forward.1} parent=0 // pred_region
    %v37 = vld [vmem:[%s1] sm:$0xf]
    %v38 = vld [vmem:[%s1 + $0x4] sm:$0xf]
    %v39 = vld [vmem:[%s2] sm:$0xf]
    %v40 = vld [vmem:[%s2 + $0x4] sm:$0xf]
    %v41 = vld [vmem:[%s2 + $0x8] sm:$0xf]
    %v42 = vld [vmem:[%s2 + $0xc] sm:$0xf]
    %v43 = vld [vmem:[%s2 + $0x10] sm:$0xf]
    %v44 = vld [vmem:[%s2 + $0x14] sm:$0xf]
    %v45 = vld [vmem:[%s2 + $0x18] sm:$0xf]
    %v46 = vld [vmem:[%s2 + $0x1c] sm:$0xf]
    %v47 = vld [vmem:[%s2 + $0x20] sm:$0xf]
    %v48 = vld [vmem:[%s2 + $0x24] sm:$0xf]
    %v49 = vld [vmem:[%s2 + $0x28] sm:$0xf]
    %v50 = vld [vmem:[%s2 + $0x2c] sm:$0xf]
    %v51 = vld [vmem:[%s2 + $0x30] sm:$0xf]
    %v52 = vld [vmem:[%s2 + $0x34] sm:$0xf]
    %v53 = vld [vmem:[%s2 + $0x38] sm:$0xf]
    %v54 = vld [vmem:[%s2 + $0x3c] sm:$0xf]
    %v57 = vunpack.c.l.b16 %v37
    %v58 = vunpack.c.l.b16 %v38
    %v59 = vpack.c.b16 %v58, %v57
    %v77 = vunpack.c.l.b16 %v39
    %v78 = vunpack.c.l.b16 %v40
    %v79 = vunpack.c.l.b16 %v41
    %v80 = vunpack.c.l.b16 %v42
    %v81 = vunpack.c.l.b16 %v43
    %v82 = vunpack.c.l.b16 %v44
    %v83 = vunpack.c.l.b16 %v45
    %v84 = vunpack.c.l.b16 %v46
    %v85 = vunpack.c.l.b16 %v47
    %v86 = vunpack.c.l.b16 %v48
    %v87 = vunpack.c.l.b16 %v49
    %v88 = vunpack.c.l.b16 %v50
    %v89 = vunpack.c.l.b16 %v51
    %v90 = vunpack.c.l.b16 %v52
    %v91 = vunpack.c.l.b16 %v53
    %v92 = vunpack.c.l.b16 %v54
    %v93 = vpack.c.b16 %v78, %v77
    %v94 = vpack.c.b16 %v80, %v79
    %v95 = vpack.c.b16 %v82, %v81
    %v96 = vpack.c.b16 %v84, %v83
    %v97 = vpack.c.b16 %v86, %v85
    %v98 = vpack.c.b16 %v88, %v87
    %v99 = vpack.c.b16 %v90, %v89
    %v100 = vpack.c.b16 %v92, %v91
    %109 = vmatprep.subr.bf16.mxu0 0
    %110 = vmatpush1.bf16.msra.mxu0 %v93
    %111 = vmatprep.subr.bf16.mxu0 0
    %112 = vmatpush1.bf16.msra.mxu0 %v94
    %113 = vmatprep.subr.bf16.mxu0 0
    %114 = vmatpush1.bf16.msra.mxu0 %v95
    %115 = vmatprep.subr.bf16.mxu0 0
    %116 = vmatpush1.bf16.msra.mxu0 %v96
    %117 = vmatprep.subr.bf16.mxu0 0
    %118 = vmatpush1.bf16.msra.mxu0 %v97
    %119 = vmatprep.subr.bf16.mxu0 0
    %120 = vmatpush1.bf16.msra.mxu0 %v98
    %121 = vmatprep.subr.bf16.mxu0 0
    %122 = vmatpush1.bf16.msra.mxu0 %v99
    %123 = vmatprep.subr.bf16.mxu0 0
    %124 = vmatpush1.bf16.msra.mxu0 %v100
    %125 = vmatprep.subr.bf16.mxu0 0
    %126 = vmatpush1.bf16.msra.mxu0 0
    %127 = vmatprep.subr.bf16.mxu0 0
    %128 = vmatpush1.bf16.msra.mxu0 0
    %129 = vmatprep.subr.bf16.mxu0 0
    %130 = vmatpush1.bf16.msra.mxu0 0
    %131 = vmatprep.subr.bf16.mxu0 0
    %132 = vmatpush1.bf16.msra.mxu0 0
    %133 = vmatprep.subr.bf16.mxu0 0
    %134 = vmatpush1.bf16.msra.mxu0 0
    %135 = vmatprep.subr.bf16.mxu0 0
    %136 = vmatpush1.bf16.msra.mxu0 0
    %137 = vmatprep.subr.bf16.mxu0 0
    %138 = vmatpush1.bf16.msra.mxu0 0
    %139 = vmatprep.subr.bf16.mxu0 0
    %140 = vmatpush1.bf16.msra.mxu0 0
    %141 = vmatprep.mubr.bf16.mxu0 0
    %142 = vmatmul.mubr.bf16.gmra.mrb[0].mxu0 %v59
    %v143 = vpop.f32.mrb[0].mxu0
    %v144 = vadd.f32 0.0, %v143
    %v145 = vpop.f32.mrb[0].mxu0
    %v146 = vpop.f32.mrb[0].mxu0
    %v147 = vadd.f32 0.0, %v146
    %v148 = vpop.f32.mrb[0].mxu0
    %149 = vdwg.mxu0
    %v150 = vlaneseq
    %v151 = vand.u32 %v150, 127
    %v152 = vld [vmem:[%s3] sm:$0xff]
    %v153 = vld [vmem:[%s3 + $0x8] sm:$0xff]
    %s154 = smul.u32 0, 128
    %v155 = vstv %s154
    %v156 = vsub.s32 %v152, %v155
    %v157 = vsub.s32 %v153, %v155
    %v158 = vld [vmem:[#allocation4] sm:$0xff]
    %v159 = vld [vmem:[#allocation4 + $0x8] sm:$0xff]
    %160 = vset.pattern.permute.xlu0 0
    %161 = vperm.xlu0 %160, %v156
    %v162 = vpop.permute.xlu0 %161
    %163 = vset.pattern.permute.xlu0 0
    %164 = vperm.xlu0 %163, %v157
    %v165 = vpop.permute.xlu0 %164
    %vm166 = vcmp.eq.s32.totalorder %v151, %v162
    %vm167 = vcmp.eq.s32.totalorder %v151, %v165
    %v168 = vsel %vm166, %v144, 0.0
    %v169 = vsel %vm167, %v147, 0.0
    %170 = vadd.xlane.f32.xlu0 %v168
    %v171 = vpop.xlane.xlu0 %170
    %172 = vadd.xlane.f32.xlu0 %v169
    %v173 = vpop.xlane.xlu0 %172
    %v174 = vadd.f32 %v158, %v171
    %v175 = vadd.f32 %v159, %v173
    %vm176 = vcmask 7168
    %177 = vst.msk [vmem:[#allocation4] sm:$0xff] %vm176, %v174
    %178 = vst.msk [vmem:[#allocation4 + $0x8] sm:$0xff] %vm176, %v175
    %v179 = vld [vmem:[#allocation2] sm:$0xff]
    %v180 = vld [vmem:[#allocation2 + $0x8] sm:$0xff]
    %181 = vmax.xlane.f32.xlu0 %v144
    %v182 = vpop.xlane.xlu0 %181
    %183 = vmax.xlane.f32.xlu0 %v147
    %v184 = vpop.xlane.xlu0 %183
    %v185 = vmax.f32 %v179, %v182
    %v186 = vmax.f32 %v180, %v184
    %v187 = vld [vmem:[#allocation3] sm:$0xff]
    %v188 = vld [vmem:[#allocation3 + $0x8] sm:$0xff]
    %v189 = vsub.f32 %v179, %v185
    %v190 = vsub.f32 %v180, %v186
    %v191 = vmul.f32 %v189, 1.442695
    %v192 = vpow.pop %v191
    %v193 = vmul.f32 %v190, 1.442695
    %v194 = vpow.pop %v193
    %v195 = vmul.f32 %v187, %v192
    %v196 = vmul.f32 %v188, %v194
    %198 = vset.pattern.permute.xlu0 0
    %199 = vperm.xlu0 %198, %v185
    %v200 = vpop.permute.xlu0 %199
    %203 = vset.pattern.permute.xlu0 0
    %204 = vperm.xlu0 %203, %v186
    %v205 = vpop.permute.xlu0 %204
    %v207 = vsub.f32 %v144, %v200
    %v208 = vsub.f32 %v147, %v205
    %v209 = vmul.f32 %v207, 1.442695
    %v210 = vpow.pop %v209
    %v211 = vmul.f32 %v208, 1.442695
    %v212 = vpow.pop %v211
    %213 = vadd.xlane.f32.xlu0 %v210
    %v214 = vpop.xlane.xlu0 %213
    %215 = vadd.xlane.f32.xlu0 %v212
    %v216 = vpop.xlane.xlu0 %215
    %v217 = vadd.f32 %v195, %v214
    %v218 = vadd.f32 %v196, %v216
    %219 = vst.msk [vmem:[#allocation3] sm:$0xff] %vm176, %v217
    %220 = vst.msk [vmem:[#allocation3 + $0x8] sm:$0xff] %vm176, %v218
    %221 = vst.msk [vmem:[#allocation2] sm:$0xff] %vm176, %v185
    %222 = vst.msk [vmem:[#allocation2 + $0x8] sm:$0xff] %vm176, %v186
  $region25: #{loss_wrapper_forward.1} parent=0 // pred_fallthru
    _
  // Predicated region
  $region26: #{loss_wrapper_forward.1} parent=0 // pred_check
    _
  $region27: #{loss_wrapper_forward.1} parent=0 // pred_check_branch
    %224 = sbr.rel (%p23) target = $region29
  $region28: #{loss_wrapper_forward.1} parent=0 // pred_region
    %v225 = vld [vmem:[#allocation2] sm:$0xff]
    %v226 = vld [vmem:[#allocation2 + $0x8] sm:$0xff]
    %v227 = vld [vmem:[#allocation3] sm:$0xff]
    %v228 = vld [vmem:[#allocation3 + $0x8] sm:$0xff]
    %v229 = vlog2.pop %v227
    %v230 = vmul.f32 %v229, 0.6931472
    %v231 = vlog2.pop %v228
    %v232 = vmul.f32 %v231, 0.6931472
    %v233 = vadd.f32 %v225, %v230
    %v234 = vadd.f32 %v226, %v232
    %v235 = vld [vmem:[#allocation4] sm:$0xff]
    %v236 = vld [vmem:[#allocation4 + $0x8] sm:$0xff]
    %v237 = vsub.f32 %v233, %v235
    %v238 = vsub.f32 %v234, %v236
    %v239 = vld [vmem:[%s4] sm:$0xff]
    %v240 = vld [vmem:[%s4 + $0x8] sm:$0xff]
    %v241 = vmul.f32 %v237, %v239
    %v242 = vmul.f32 %v238, %v240
    %vm243 = vcmask 7168
    %244 = vst.msk [vmem:[%s5] sm:$0xff] %vm243, %v241
    %245 = vst.msk [vmem:[%s5 + $0x8] sm:$0xff] %vm243, %v242
  $region29: #{loss_wrapper_forward.1} parent=0 // pred_fallthru
    _
  %p246 = scmp.eq.s32.totalorder %s20, 0
  %p247 = pnand %p246, %p22
  %p248 = pneg %p247
  // Predicated region
  $region30: #{loss_wrapper_forward.1} parent=0 // pred_check
    _
  $region31: #{loss_wrapper_forward.1} parent=0 // pred_check_branch
    %250 = sbr.rel (%p247) target = $region33
  $region32: #{loss_wrapper_forward.1} parent=0 // pred_region
    %vm251 = vcmask 7168
    %252 = vst.msk [vmem:[%s5] sm:$0xff] %vm251, 0.0
    %253 = vst.msk [vmem:[%s5 + $0x8] sm:$0xff] %vm251, 0.0
  $region33: #{loss_wrapper_forward.1} parent=0 // pred_fallthru
    _
  // Predicated region
  $region34: #{loss_wrapper_forward.1} parent=0 // pred_check
    _
  $region35: #{loss_wrapper_forward.1} parent=0 // pred_check_branch
    %255 = sbr.rel (0) target = $region37
  $region36: #{loss_wrapper_forward.1} parent=0 // pred_region
    _
  $region37: #{loss_wrapper_forward.1} parent=0 // pred_fallthru
    _
  // Predicated region
  $region38: #{loss_wrapper_forward.1} parent=0 // pred_check
    _
  $region39: #{loss_wrapper_forward.1} parent=0 // pred_check_branch
    %257 = sbr.rel (0) target = $region41
  $region40: #{loss_wrapper_forward.1} parent=0 // pred_region
    _
  $region41: #{loss_wrapper_forward.1} parent=0 // pred_fallthru
    _

</llo_original>
